<compile_context>
chip_gen: v5e
topology: v5e:2x2
jax: 0.10.0
libtpu: 0.0.40
codegen_flags: <defaults>
</compile_context>

<pallas_src>
import jax
import jax.numpy as jnp
from jax.experimental import pallas as pl
from jax.experimental.pallas import tpu as pltpu

LANE = 128


def policy_net_kernel(w1_ref, b1_ref, w2_ref, b2_ref, x_ref, out_ref):
    # w1_ref: SMEM [10, 4], b1_ref: SMEM [10], w2_ref: SMEM [2, 10], b2_ref: SMEM [2]
    # x_ref:  VMEM [4, SB, 128]   (feature rows, batch on sublanes x lanes -> dense vregs)
    # out_ref: VMEM [2, SB, 128]
    x_rows = [x_ref[k] for k in range(4)]  # 4 x (SB, 128), lane/sublane dense f32

    # Hoist the 60 weight + 12 bias scalars out of the fma loops (single SMEM read each).
    w1 = [[w1_ref[j, k] for k in range(4)] for j in range(10)]
    b1 = [b1_ref[j] for j in range(10)]
    w2 = [[w2_ref[c, j] for j in range(10)] for c in range(2)]
    b2 = [b2_ref[c] for c in range(2)]

    # fcA1 + ReLU: 10 hidden rows, each 4 broadcast-FMAs on the VPU.
    h = []
    for j in range(10):
        acc = x_rows[0] * w1[j][0]
        for k in range(1, 4):
            acc = acc + x_rows[k] * w1[j][k]
        h.append(jnp.maximum(acc + b1[j], 0.0))

    # fcA2: 2 logit rows, each 10 broadcast-FMAs.
    logits = []
    for c in range(2):
        acc = h[0] * w2[c][0]
        for j in range(1, 10):
            acc = acc + h[j] * w2[c][j]
        logits.append(acc + b2[c])

    # 2-class softmax: purely elementwise (VALU + EUP), no axis reductions over width-2 dims.
    l0, l1 = logits
    m = jnp.maximum(l0, l1)
    e0 = jnp.exp(l0 - m)
    e1 = jnp.exp(l1 - m)
    s = e0 + e1
    inv = pl.reciprocal(s, approx=True)      # EUP slot (cheap)
    inv = inv * (2.0 - s * inv)              # one Newton step -> ~f32 accuracy, stays on VALU
    out_ref[0] = e0 * inv
    out_ref[1] = e1 * inv


def policy_net_forward(x, w1, b1, w2, b2, *, max_tile_rows=8192):
    """x: [B, 4] f32. Weights in torch-native layout: w1 [10, 4], b1 [10], w2 [2, 10], b2 [2]."""
    x = x.astype(jnp.float32)
    B = x.shape[0]

    # Tile the batch: s_total lane-groups of 128 rows, sb groups per grid step.
    s_total = pl.cdiv(B, LANE)
    sb = min(max(max_tile_rows // LANE, 1), s_total)
    if sb >= 8:
        sb = (sb // 8) * 8                       # keep sublane tile a multiple of 8 when tiling
        s_total = pl.cdiv(s_total, sb) * sb      # pad so the grid divides evenly
    else:
        sb = s_total                             # single block == full extent (always legal)
    Bp = s_total * LANE
    grid = (s_total // sb,)

    # Batch onto lanes: [B, 4] -> [4, Bp] (zero padded) -> [4, s_total, 128].
    xt = jnp.pad(x.T, ((0, 0), (0, Bp - B)))
    x3 = xt.reshape(4, s_total, LANE)

    out3 = pl.pallas_call(
        policy_net_kernel,
        out_shape=jax.ShapeDtypeStruct((2, s_total, LANE), jnp.float32),
        grid_spec=pl.GridSpec(
            grid=grid,
            in_specs=[
                pl.BlockSpec(memory_space=pltpu.MemorySpace.SMEM),   # w1 [10, 4]
                pl.BlockSpec(memory_space=pltpu.MemorySpace.SMEM),   # b1 [10]
                pl.BlockSpec(memory_space=pltpu.MemorySpace.SMEM),   # w2 [2, 10]
                pl.BlockSpec(memory_space=pltpu.MemorySpace.SMEM),   # b2 [2]
                pl.BlockSpec((4, sb, LANE), lambda i: (0, i, 0)),    # x batch tile
            ],
            out_specs=pl.BlockSpec((2, sb, LANE), lambda i: (0, i, 0)),
        ),
        compiler_params=pltpu.CompilerParams(
            dimension_semantics=("parallel",),   # shard batch tiles across TCs on v7x
        ),
    )(
        w1.astype(jnp.float32),
        b1.astype(jnp.float32),
        w2.astype(jnp.float32),
        b2.astype(jnp.float32),
        x3,
    )

    # [2, s_total, 128] -> [2, Bp] -> [B, 2]
    return out3.reshape(2, Bp)[:, :B].T


def init_params(key):
    # Deterministic init mimicking torch.nn.Linear default: U(-1/sqrt(fan_in), 1/sqrt(fan_in)),
    # torch-native [out, in] weight layout.
    k1, k2, k3, k4 = jax.random.split(key, 4)
    bound1 = 1.0 / jnp.sqrt(4.0)
    bound2 = 1.0 / jnp.sqrt(10.0)
    w1 = jax.random.uniform(k1, (10, 4), jnp.float32, -bound1, bound1)
    b1 = jax.random.uniform(k2, (10,), jnp.float32, -bound1, bound1)
    w2 = jax.random.uniform(k3, (2, 10), jnp.float32, -bound2, bound2)
    b2 = jax.random.uniform(k4, (2,), jnp.float32, -bound2, bound2)
    return w1, b1, w2, b2


if __name__ == "__main__":
    key = jax.random.PRNGKey(0)
    kx, kp = jax.random.split(key)

    B = 8  # small batch
    x = jax.random.normal(kx, (B, 4), jnp.float32)
    w1, b1, w2, b2 = init_params(kp)

    out = policy_net_forward(x, w1, b1, w2, b2)
    out = jax.block_until_ready(out)

    # Pure-JAX reference (PyTorch semantics: x @ W.T + b)
    h_ref = jnp.maximum(x @ w1.T + b1, 0.0)
    ref = jax.nn.softmax(h_ref @ w2.T + b2, axis=-1)
    assert out.shape == (B, 2)
    assert jnp.allclose(out, ref, atol=1e-5, rtol=1e-5), float(jnp.max(jnp.abs(out - ref)))
    assert jnp.allclose(jnp.sum(out, axis=-1), 1.0, atol=1e-5)

    print("KERNEL_OK")
</pallas_src>

<mosaic_0001>
module attributes {stable_mosaic.version = 11 : i64} {
  func.func @policy_net_kernel(%arg0: i32, %arg1: memref<10x4xf32, #tpu.memory_space<smem>>, %arg2: memref<10xf32, #tpu.memory_space<smem>>, %arg3: memref<2x10xf32, #tpu.memory_space<smem>>, %arg4: memref<2xf32, #tpu.memory_space<smem>>, %arg5: memref<4x1x128xf32, #tpu.memory_space<vmem>>, %arg6: memref<2x1x128xf32, #tpu.memory_space<vmem>>) attributes {dimension_semantics = [#tpu.dimension_semantics<parallel>], iteration_bounds = array<i64: 1>, scalar_prefetch = 0 : i64, scratch_operands = 0 : i64, tpu.core_type = #tpu.core_type<tc>, window_params = [{transform_indices = @transform_0, window_bounds = array<i64: 10, 4>}, {transform_indices = @transform_1, window_bounds = array<i64: 10>}, {transform_indices = @transform_2, window_bounds = array<i64: 2, 10>}, {transform_indices = @transform_3, window_bounds = array<i64: 2>}, {transform_indices = @transform_4, window_bounds = array<i64: 4, 1, 128>}, {transform_indices = @transform_5, window_bounds = array<i64: 2, 1, 128>}]} {
    %c0 = arith.constant 0 : index
    %c0_0 = arith.constant 0 : index
    %c0_1 = arith.constant 0 : index
    %0 = vector.load %arg5[%c0, %c0_0, %c0_1] : memref<4x1x128xf32, #tpu.memory_space<vmem>>, vector<1x1x128xf32>
    %1 = vector.shape_cast %0 : vector<1x1x128xf32> to vector<1x128xf32>
    %c1 = arith.constant 1 : index
    %c0_2 = arith.constant 0 : index
    %c0_3 = arith.constant 0 : index
    %2 = vector.load %arg5[%c1, %c0_2, %c0_3] : memref<4x1x128xf32, #tpu.memory_space<vmem>>, vector<1x1x128xf32>
    %3 = vector.shape_cast %2 : vector<1x1x128xf32> to vector<1x128xf32>
    %c2 = arith.constant 2 : index
    %c0_4 = arith.constant 0 : index
    %c0_5 = arith.constant 0 : index
    %4 = vector.load %arg5[%c2, %c0_4, %c0_5] : memref<4x1x128xf32, #tpu.memory_space<vmem>>, vector<1x1x128xf32>
    %5 = vector.shape_cast %4 : vector<1x1x128xf32> to vector<1x128xf32>
    %c3 = arith.constant 3 : index
    %c0_6 = arith.constant 0 : index
    %c0_7 = arith.constant 0 : index
    %6 = vector.load %arg5[%c3, %c0_6, %c0_7] : memref<4x1x128xf32, #tpu.memory_space<vmem>>, vector<1x1x128xf32>
    %7 = vector.shape_cast %6 : vector<1x1x128xf32> to vector<1x128xf32>
    %c0_8 = arith.constant 0 : index
    %c0_9 = arith.constant 0 : index
    %8 = memref.load %arg1[%c0_8, %c0_9] : memref<10x4xf32, #tpu.memory_space<smem>>
    %c0_10 = arith.constant 0 : index
    %c1_11 = arith.constant 1 : index
    %9 = memref.load %arg1[%c0_10, %c1_11] : memref<10x4xf32, #tpu.memory_space<smem>>
    %c0_12 = arith.constant 0 : index
    %c2_13 = arith.constant 2 : index
    %10 = memref.load %arg1[%c0_12, %c2_13] : memref<10x4xf32, #tpu.memory_space<smem>>
    %c0_14 = arith.constant 0 : index
    %c3_15 = arith.constant 3 : index
    %11 = memref.load %arg1[%c0_14, %c3_15] : memref<10x4xf32, #tpu.memory_space<smem>>
    %c1_16 = arith.constant 1 : index
    %c0_17 = arith.constant 0 : index
    %12 = memref.load %arg1[%c1_16, %c0_17] : memref<10x4xf32, #tpu.memory_space<smem>>
    %c1_18 = arith.constant 1 : index
    %c1_19 = arith.constant 1 : index
    %13 = memref.load %arg1[%c1_18, %c1_19] : memref<10x4xf32, #tpu.memory_space<smem>>
    %c1_20 = arith.constant 1 : index
    %c2_21 = arith.constant 2 : index
    %14 = memref.load %arg1[%c1_20, %c2_21] : memref<10x4xf32, #tpu.memory_space<smem>>
    %c1_22 = arith.constant 1 : index
    %c3_23 = arith.constant 3 : index
    %15 = memref.load %arg1[%c1_22, %c3_23] : memref<10x4xf32, #tpu.memory_space<smem>>
    %c2_24 = arith.constant 2 : index
    %c0_25 = arith.constant 0 : index
    %16 = memref.load %arg1[%c2_24, %c0_25] : memref<10x4xf32, #tpu.memory_space<smem>>
    %c2_26 = arith.constant 2 : index
    %c1_27 = arith.constant 1 : index
    %17 = memref.load %arg1[%c2_26, %c1_27] : memref<10x4xf32, #tpu.memory_space<smem>>
    %c2_28 = arith.constant 2 : index
    %c2_29 = arith.constant 2 : index
    %18 = memref.load %arg1[%c2_28, %c2_29] : memref<10x4xf32, #tpu.memory_space<smem>>
    %c2_30 = arith.constant 2 : index
    %c3_31 = arith.constant 3 : index
    %19 = memref.load %arg1[%c2_30, %c3_31] : memref<10x4xf32, #tpu.memory_space<smem>>
    %c3_32 = arith.constant 3 : index
    %c0_33 = arith.constant 0 : index
    %20 = memref.load %arg1[%c3_32, %c0_33] : memref<10x4xf32, #tpu.memory_space<smem>>
    %c3_34 = arith.constant 3 : index
    %c1_35 = arith.constant 1 : index
    %21 = memref.load %arg1[%c3_34, %c1_35] : memref<10x4xf32, #tpu.memory_space<smem>>
    %c3_36 = arith.constant 3 : index
    %c2_37 = arith.constant 2 : index
    %22 = memref.load %arg1[%c3_36, %c2_37] : memref<10x4xf32, #tpu.memory_space<smem>>
    %c3_38 = arith.constant 3 : index
    %c3_39 = arith.constant 3 : index
    %23 = memref.load %arg1[%c3_38, %c3_39] : memref<10x4xf32, #tpu.memory_space<smem>>
    %c4 = arith.constant 4 : index
    %c0_40 = arith.constant 0 : index
    %24 = memref.load %arg1[%c4, %c0_40] : memref<10x4xf32, #tpu.memory_space<smem>>
    %c4_41 = arith.constant 4 : index
    %c1_42 = arith.constant 1 : index
    %25 = memref.load %arg1[%c4_41, %c1_42] : memref<10x4xf32, #tpu.memory_space<smem>>
    %c4_43 = arith.constant 4 : index
    %c2_44 = arith.constant 2 : index
    %26 = memref.load %arg1[%c4_43, %c2_44] : memref<10x4xf32, #tpu.memory_space<smem>>
    %c4_45 = arith.constant 4 : index
    %c3_46 = arith.constant 3 : index
    %27 = memref.load %arg1[%c4_45, %c3_46] : memref<10x4xf32, #tpu.memory_space<smem>>
    %c5 = arith.constant 5 : index
    %c0_47 = arith.constant 0 : index
    %28 = memref.load %arg1[%c5, %c0_47] : memref<10x4xf32, #tpu.memory_space<smem>>
    %c5_48 = arith.constant 5 : index
    %c1_49 = arith.constant 1 : index
    %29 = memref.load %arg1[%c5_48, %c1_49] : memref<10x4xf32, #tpu.memory_space<smem>>
    %c5_50 = arith.constant 5 : index
    %c2_51 = arith.constant 2 : index
    %30 = memref.load %arg1[%c5_50, %c2_51] : memref<10x4xf32, #tpu.memory_space<smem>>
    %c5_52 = arith.constant 5 : index
    %c3_53 = arith.constant 3 : index
    %31 = memref.load %arg1[%c5_52, %c3_53] : memref<10x4xf32, #tpu.memory_space<smem>>
    %c6 = arith.constant 6 : index
    %c0_54 = arith.constant 0 : index
    %32 = memref.load %arg1[%c6, %c0_54] : memref<10x4xf32, #tpu.memory_space<smem>>
    %c6_55 = arith.constant 6 : index
    %c1_56 = arith.constant 1 : index
    %33 = memref.load %arg1[%c6_55, %c1_56] : memref<10x4xf32, #tpu.memory_space<smem>>
    %c6_57 = arith.constant 6 : index
    %c2_58 = arith.constant 2 : index
    %34 = memref.load %arg1[%c6_57, %c2_58] : memref<10x4xf32, #tpu.memory_space<smem>>
    %c6_59 = arith.constant 6 : index
    %c3_60 = arith.constant 3 : index
    %35 = memref.load %arg1[%c6_59, %c3_60] : memref<10x4xf32, #tpu.memory_space<smem>>
    %c7 = arith.constant 7 : index
    %c0_61 = arith.constant 0 : index
    %36 = memref.load %arg1[%c7, %c0_61] : memref<10x4xf32, #tpu.memory_space<smem>>
    %c7_62 = arith.constant 7 : index
    %c1_63 = arith.constant 1 : index
    %37 = memref.load %arg1[%c7_62, %c1_63] : memref<10x4xf32, #tpu.memory_space<smem>>
    %c7_64 = arith.constant 7 : index
    %c2_65 = arith.constant 2 : index
    %38 = memref.load %arg1[%c7_64, %c2_65] : memref<10x4xf32, #tpu.memory_space<smem>>
    %c7_66 = arith.constant 7 : index
    %c3_67 = arith.constant 3 : index
    %39 = memref.load %arg1[%c7_66, %c3_67] : memref<10x4xf32, #tpu.memory_space<smem>>
    %c8 = arith.constant 8 : index
    %c0_68 = arith.constant 0 : index
    %40 = memref.load %arg1[%c8, %c0_68] : memref<10x4xf32, #tpu.memory_space<smem>>
    %c8_69 = arith.constant 8 : index
    %c1_70 = arith.constant 1 : index
    %41 = memref.load %arg1[%c8_69, %c1_70] : memref<10x4xf32, #tpu.memory_space<smem>>
    %c8_71 = arith.constant 8 : index
    %c2_72 = arith.constant 2 : index
    %42 = memref.load %arg1[%c8_71, %c2_72] : memref<10x4xf32, #tpu.memory_space<smem>>
    %c8_73 = arith.constant 8 : index
    %c3_74 = arith.constant 3 : index
    %43 = memref.load %arg1[%c8_73, %c3_74] : memref<10x4xf32, #tpu.memory_space<smem>>
    %c9 = arith.constant 9 : index
    %c0_75 = arith.constant 0 : index
    %44 = memref.load %arg1[%c9, %c0_75] : memref<10x4xf32, #tpu.memory_space<smem>>
    %c9_76 = arith.constant 9 : index
    %c1_77 = arith.constant 1 : index
    %45 = memref.load %arg1[%c9_76, %c1_77] : memref<10x4xf32, #tpu.memory_space<smem>>
    %c9_78 = arith.constant 9 : index
    %c2_79 = arith.constant 2 : index
    %46 = memref.load %arg1[%c9_78, %c2_79] : memref<10x4xf32, #tpu.memory_space<smem>>
    %c9_80 = arith.constant 9 : index
    %c3_81 = arith.constant 3 : index
    %47 = memref.load %arg1[%c9_80, %c3_81] : memref<10x4xf32, #tpu.memory_space<smem>>
    %c0_82 = arith.constant 0 : index
    %48 = memref.load %arg2[%c0_82] : memref<10xf32, #tpu.memory_space<smem>>
    %c1_83 = arith.constant 1 : index
    %49 = memref.load %arg2[%c1_83] : memref<10xf32, #tpu.memory_space<smem>>
    %c2_84 = arith.constant 2 : index
    %50 = memref.load %arg2[%c2_84] : memref<10xf32, #tpu.memory_space<smem>>
    %c3_85 = arith.constant 3 : index
    %51 = memref.load %arg2[%c3_85] : memref<10xf32, #tpu.memory_space<smem>>
    %c4_86 = arith.constant 4 : index
    %52 = memref.load %arg2[%c4_86] : memref<10xf32, #tpu.memory_space<smem>>
    %c5_87 = arith.constant 5 : index
    %53 = memref.load %arg2[%c5_87] : memref<10xf32, #tpu.memory_space<smem>>
    %c6_88 = arith.constant 6 : index
    %54 = memref.load %arg2[%c6_88] : memref<10xf32, #tpu.memory_space<smem>>
    %c7_89 = arith.constant 7 : index
    %55 = memref.load %arg2[%c7_89] : memref<10xf32, #tpu.memory_space<smem>>
    %c8_90 = arith.constant 8 : index
    %56 = memref.load %arg2[%c8_90] : memref<10xf32, #tpu.memory_space<smem>>
    %c9_91 = arith.constant 9 : index
    %57 = memref.load %arg2[%c9_91] : memref<10xf32, #tpu.memory_space<smem>>
    %c0_92 = arith.constant 0 : index
    %c0_93 = arith.constant 0 : index
    %58 = memref.load %arg3[%c0_92, %c0_93] : memref<2x10xf32, #tpu.memory_space<smem>>
    %c0_94 = arith.constant 0 : index
    %c1_95 = arith.constant 1 : index
    %59 = memref.load %arg3[%c0_94, %c1_95] : memref<2x10xf32, #tpu.memory_space<smem>>
    %c0_96 = arith.constant 0 : index
    %c2_97 = arith.constant 2 : index
    %60 = memref.load %arg3[%c0_96, %c2_97] : memref<2x10xf32, #tpu.memory_space<smem>>
    %c0_98 = arith.constant 0 : index
    %c3_99 = arith.constant 3 : index
    %61 = memref.load %arg3[%c0_98, %c3_99] : memref<2x10xf32, #tpu.memory_space<smem>>
    %c0_100 = arith.constant 0 : index
    %c4_101 = arith.constant 4 : index
    %62 = memref.load %arg3[%c0_100, %c4_101] : memref<2x10xf32, #tpu.memory_space<smem>>
    %c0_102 = arith.constant 0 : index
    %c5_103 = arith.constant 5 : index
    %63 = memref.load %arg3[%c0_102, %c5_103] : memref<2x10xf32, #tpu.memory_space<smem>>
    %c0_104 = arith.constant 0 : index
    %c6_105 = arith.constant 6 : index
    %64 = memref.load %arg3[%c0_104, %c6_105] : memref<2x10xf32, #tpu.memory_space<smem>>
    %c0_106 = arith.constant 0 : index
    %c7_107 = arith.constant 7 : index
    %65 = memref.load %arg3[%c0_106, %c7_107] : memref<2x10xf32, #tpu.memory_space<smem>>
    %c0_108 = arith.constant 0 : index
    %c8_109 = arith.constant 8 : index
    %66 = memref.load %arg3[%c0_108, %c8_109] : memref<2x10xf32, #tpu.memory_space<smem>>
    %c0_110 = arith.constant 0 : index
    %c9_111 = arith.constant 9 : index
    %67 = memref.load %arg3[%c0_110, %c9_111] : memref<2x10xf32, #tpu.memory_space<smem>>
    %c1_112 = arith.constant 1 : index
    %c0_113 = arith.constant 0 : index
    %68 = memref.load %arg3[%c1_112, %c0_113] : memref<2x10xf32, #tpu.memory_space<smem>>
    %c1_114 = arith.constant 1 : index
    %c1_115 = arith.constant 1 : index
    %69 = memref.load %arg3[%c1_114, %c1_115] : memref<2x10xf32, #tpu.memory_space<smem>>
    %c1_116 = arith.constant 1 : index
    %c2_117 = arith.constant 2 : index
    %70 = memref.load %arg3[%c1_116, %c2_117] : memref<2x10xf32, #tpu.memory_space<smem>>
    %c1_118 = arith.constant 1 : index
    %c3_119 = arith.constant 3 : index
    %71 = memref.load %arg3[%c1_118, %c3_119] : memref<2x10xf32, #tpu.memory_space<smem>>
    %c1_120 = arith.constant 1 : index
    %c4_121 = arith.constant 4 : index
    %72 = memref.load %arg3[%c1_120, %c4_121] : memref<2x10xf32, #tpu.memory_space<smem>>
    %c1_122 = arith.constant 1 : index
    %c5_123 = arith.constant 5 : index
    %73 = memref.load %arg3[%c1_122, %c5_123] : memref<2x10xf32, #tpu.memory_space<smem>>
    %c1_124 = arith.constant 1 : index
    %c6_125 = arith.constant 6 : index
    %74 = memref.load %arg3[%c1_124, %c6_125] : memref<2x10xf32, #tpu.memory_space<smem>>
    %c1_126 = arith.constant 1 : index
    %c7_127 = arith.constant 7 : index
    %75 = memref.load %arg3[%c1_126, %c7_127] : memref<2x10xf32, #tpu.memory_space<smem>>
    %c1_128 = arith.constant 1 : index
    %c8_129 = arith.constant 8 : index
    %76 = memref.load %arg3[%c1_128, %c8_129] : memref<2x10xf32, #tpu.memory_space<smem>>
    %c1_130 = arith.constant 1 : index
    %c9_131 = arith.constant 9 : index
    %77 = memref.load %arg3[%c1_130, %c9_131] : memref<2x10xf32, #tpu.memory_space<smem>>
    %c0_132 = arith.constant 0 : index
    %78 = memref.load %arg4[%c0_132] : memref<2xf32, #tpu.memory_space<smem>>
    %c1_133 = arith.constant 1 : index
    %79 = memref.load %arg4[%c1_133] : memref<2xf32, #tpu.memory_space<smem>>
    %80 = vector.broadcast %8 : f32 to vector<1x128xf32>
    %81 = arith.mulf %1, %80 : vector<1x128xf32>
    %82 = vector.broadcast %9 : f32 to vector<1x128xf32>
    %83 = arith.mulf %3, %82 : vector<1x128xf32>
    %84 = arith.addf %81, %83 : vector<1x128xf32>
    %85 = vector.broadcast %10 : f32 to vector<1x128xf32>
    %86 = arith.mulf %5, %85 : vector<1x128xf32>
    %87 = arith.addf %84, %86 : vector<1x128xf32>
    %88 = vector.broadcast %11 : f32 to vector<1x128xf32>
    %89 = arith.mulf %7, %88 : vector<1x128xf32>
    %90 = arith.addf %87, %89 : vector<1x128xf32>
    %91 = vector.broadcast %48 : f32 to vector<1x128xf32>
    %92 = arith.addf %90, %91 : vector<1x128xf32>
    %cst = arith.constant 0.000000e+00 : f32
    %93 = vector.broadcast %cst : f32 to vector<1x128xf32>
    %94 = arith.maximumf %92, %93 : vector<1x128xf32>
    %95 = vector.broadcast %12 : f32 to vector<1x128xf32>
    %96 = arith.mulf %1, %95 : vector<1x128xf32>
    %97 = vector.broadcast %13 : f32 to vector<1x128xf32>
    %98 = arith.mulf %3, %97 : vector<1x128xf32>
    %99 = arith.addf %96, %98 : vector<1x128xf32>
    %100 = vector.broadcast %14 : f32 to vector<1x128xf32>
    %101 = arith.mulf %5, %100 : vector<1x128xf32>
    %102 = arith.addf %99, %101 : vector<1x128xf32>
    %103 = vector.broadcast %15 : f32 to vector<1x128xf32>
    %104 = arith.mulf %7, %103 : vector<1x128xf32>
    %105 = arith.addf %102, %104 : vector<1x128xf32>
    %106 = vector.broadcast %49 : f32 to vector<1x128xf32>
    %107 = arith.addf %105, %106 : vector<1x128xf32>
    %cst_134 = arith.constant 0.000000e+00 : f32
    %108 = vector.broadcast %cst_134 : f32 to vector<1x128xf32>
    %109 = arith.maximumf %107, %108 : vector<1x128xf32>
    %110 = vector.broadcast %16 : f32 to vector<1x128xf32>
    %111 = arith.mulf %1, %110 : vector<1x128xf32>
    %112 = vector.broadcast %17 : f32 to vector<1x128xf32>
    %113 = arith.mulf %3, %112 : vector<1x128xf32>
    %114 = arith.addf %111, %113 : vector<1x128xf32>
    %115 = vector.broadcast %18 : f32 to vector<1x128xf32>
    %116 = arith.mulf %5, %115 : vector<1x128xf32>
    %117 = arith.addf %114, %116 : vector<1x128xf32>
    %118 = vector.broadcast %19 : f32 to vector<1x128xf32>
    %119 = arith.mulf %7, %118 : vector<1x128xf32>
    %120 = arith.addf %117, %119 : vector<1x128xf32>
    %121 = vector.broadcast %50 : f32 to vector<1x128xf32>
    %122 = arith.addf %120, %121 : vector<1x128xf32>
    %cst_135 = arith.constant 0.000000e+00 : f32
    %123 = vector.broadcast %cst_135 : f32 to vector<1x128xf32>
    %124 = arith.maximumf %122, %123 : vector<1x128xf32>
    %125 = vector.broadcast %20 : f32 to vector<1x128xf32>
    %126 = arith.mulf %1, %125 : vector<1x128xf32>
    %127 = vector.broadcast %21 : f32 to vector<1x128xf32>
    %128 = arith.mulf %3, %127 : vector<1x128xf32>
    %129 = arith.addf %126, %128 : vector<1x128xf32>
    %130 = vector.broadcast %22 : f32 to vector<1x128xf32>
    %131 = arith.mulf %5, %130 : vector<1x128xf32>
    %132 = arith.addf %129, %131 : vector<1x128xf32>
    %133 = vector.broadcast %23 : f32 to vector<1x128xf32>
    %134 = arith.mulf %7, %133 : vector<1x128xf32>
    %135 = arith.addf %132, %134 : vector<1x128xf32>
    %136 = vector.broadcast %51 : f32 to vector<1x128xf32>
    %137 = arith.addf %135, %136 : vector<1x128xf32>
    %cst_136 = arith.constant 0.000000e+00 : f32
    %138 = vector.broadcast %cst_136 : f32 to vector<1x128xf32>
    %139 = arith.maximumf %137, %138 : vector<1x128xf32>
    %140 = vector.broadcast %24 : f32 to vector<1x128xf32>
    %141 = arith.mulf %1, %140 : vector<1x128xf32>
    %142 = vector.broadcast %25 : f32 to vector<1x128xf32>
    %143 = arith.mulf %3, %142 : vector<1x128xf32>
    %144 = arith.addf %141, %143 : vector<1x128xf32>
    %145 = vector.broadcast %26 : f32 to vector<1x128xf32>
    %146 = arith.mulf %5, %145 : vector<1x128xf32>
    %147 = arith.addf %144, %146 : vector<1x128xf32>
    %148 = vector.broadcast %27 : f32 to vector<1x128xf32>
    %149 = arith.mulf %7, %148 : vector<1x128xf32>
    %150 = arith.addf %147, %149 : vector<1x128xf32>
    %151 = vector.broadcast %52 : f32 to vector<1x128xf32>
    %152 = arith.addf %150, %151 : vector<1x128xf32>
    %cst_137 = arith.constant 0.000000e+00 : f32
    %153 = vector.broadcast %cst_137 : f32 to vector<1x128xf32>
    %154 = arith.maximumf %152, %153 : vector<1x128xf32>
    %155 = vector.broadcast %28 : f32 to vector<1x128xf32>
    %156 = arith.mulf %1, %155 : vector<1x128xf32>
    %157 = vector.broadcast %29 : f32 to vector<1x128xf32>
    %158 = arith.mulf %3, %157 : vector<1x128xf32>
    %159 = arith.addf %156, %158 : vector<1x128xf32>
    %160 = vector.broadcast %30 : f32 to vector<1x128xf32>
    %161 = arith.mulf %5, %160 : vector<1x128xf32>
    %162 = arith.addf %159, %161 : vector<1x128xf32>
    %163 = vector.broadcast %31 : f32 to vector<1x128xf32>
    %164 = arith.mulf %7, %163 : vector<1x128xf32>
    %165 = arith.addf %162, %164 : vector<1x128xf32>
    %166 = vector.broadcast %53 : f32 to vector<1x128xf32>
    %167 = arith.addf %165, %166 : vector<1x128xf32>
    %cst_138 = arith.constant 0.000000e+00 : f32
    %168 = vector.broadcast %cst_138 : f32 to vector<1x128xf32>
    %169 = arith.maximumf %167, %168 : vector<1x128xf32>
    %170 = vector.broadcast %32 : f32 to vector<1x128xf32>
    %171 = arith.mulf %1, %170 : vector<1x128xf32>
    %172 = vector.broadcast %33 : f32 to vector<1x128xf32>
    %173 = arith.mulf %3, %172 : vector<1x128xf32>
    %174 = arith.addf %171, %173 : vector<1x128xf32>
    %175 = vector.broadcast %34 : f32 to vector<1x128xf32>
    %176 = arith.mulf %5, %175 : vector<1x128xf32>
    %177 = arith.addf %174, %176 : vector<1x128xf32>
    %178 = vector.broadcast %35 : f32 to vector<1x128xf32>
    %179 = arith.mulf %7, %178 : vector<1x128xf32>
    %180 = arith.addf %177, %179 : vector<1x128xf32>
    %181 = vector.broadcast %54 : f32 to vector<1x128xf32>
    %182 = arith.addf %180, %181 : vector<1x128xf32>
    %cst_139 = arith.constant 0.000000e+00 : f32
    %183 = vector.broadcast %cst_139 : f32 to vector<1x128xf32>
    %184 = arith.maximumf %182, %183 : vector<1x128xf32>
    %185 = vector.broadcast %36 : f32 to vector<1x128xf32>
    %186 = arith.mulf %1, %185 : vector<1x128xf32>
    %187 = vector.broadcast %37 : f32 to vector<1x128xf32>
    %188 = arith.mulf %3, %187 : vector<1x128xf32>
    %189 = arith.addf %186, %188 : vector<1x128xf32>
    %190 = vector.broadcast %38 : f32 to vector<1x128xf32>
    %191 = arith.mulf %5, %190 : vector<1x128xf32>
    %192 = arith.addf %189, %191 : vector<1x128xf32>
    %193 = vector.broadcast %39 : f32 to vector<1x128xf32>
    %194 = arith.mulf %7, %193 : vector<1x128xf32>
    %195 = arith.addf %192, %194 : vector<1x128xf32>
    %196 = vector.broadcast %55 : f32 to vector<1x128xf32>
    %197 = arith.addf %195, %196 : vector<1x128xf32>
    %cst_140 = arith.constant 0.000000e+00 : f32
    %198 = vector.broadcast %cst_140 : f32 to vector<1x128xf32>
    %199 = arith.maximumf %197, %198 : vector<1x128xf32>
    %200 = vector.broadcast %40 : f32 to vector<1x128xf32>
    %201 = arith.mulf %1, %200 : vector<1x128xf32>
    %202 = vector.broadcast %41 : f32 to vector<1x128xf32>
    %203 = arith.mulf %3, %202 : vector<1x128xf32>
    %204 = arith.addf %201, %203 : vector<1x128xf32>
    %205 = vector.broadcast %42 : f32 to vector<1x128xf32>
    %206 = arith.mulf %5, %205 : vector<1x128xf32>
    %207 = arith.addf %204, %206 : vector<1x128xf32>
    %208 = vector.broadcast %43 : f32 to vector<1x128xf32>
    %209 = arith.mulf %7, %208 : vector<1x128xf32>
    %210 = arith.addf %207, %209 : vector<1x128xf32>
    %211 = vector.broadcast %56 : f32 to vector<1x128xf32>
    %212 = arith.addf %210, %211 : vector<1x128xf32>
    %cst_141 = arith.constant 0.000000e+00 : f32
    %213 = vector.broadcast %cst_141 : f32 to vector<1x128xf32>
    %214 = arith.maximumf %212, %213 : vector<1x128xf32>
    %215 = vector.broadcast %44 : f32 to vector<1x128xf32>
    %216 = arith.mulf %1, %215 : vector<1x128xf32>
    %217 = vector.broadcast %45 : f32 to vector<1x128xf32>
    %218 = arith.mulf %3, %217 : vector<1x128xf32>
    %219 = arith.addf %216, %218 : vector<1x128xf32>
    %220 = vector.broadcast %46 : f32 to vector<1x128xf32>
    %221 = arith.mulf %5, %220 : vector<1x128xf32>
    %222 = arith.addf %219, %221 : vector<1x128xf32>
    %223 = vector.broadcast %47 : f32 to vector<1x128xf32>
    %224 = arith.mulf %7, %223 : vector<1x128xf32>
    %225 = arith.addf %222, %224 : vector<1x128xf32>
    %226 = vector.broadcast %57 : f32 to vector<1x128xf32>
    %227 = arith.addf %225, %226 : vector<1x128xf32>
    %cst_142 = arith.constant 0.000000e+00 : f32
    %228 = vector.broadcast %cst_142 : f32 to vector<1x128xf32>
    %229 = arith.maximumf %227, %228 : vector<1x128xf32>
    %230 = vector.broadcast %58 : f32 to vector<1x128xf32>
    %231 = arith.mulf %94, %230 : vector<1x128xf32>
    %232 = vector.broadcast %59 : f32 to vector<1x128xf32>
    %233 = arith.mulf %109, %232 : vector<1x128xf32>
    %234 = arith.addf %231, %233 : vector<1x128xf32>
    %235 = vector.broadcast %60 : f32 to vector<1x128xf32>
    %236 = arith.mulf %124, %235 : vector<1x128xf32>
    %237 = arith.addf %234, %236 : vector<1x128xf32>
    %238 = vector.broadcast %61 : f32 to vector<1x128xf32>
    %239 = arith.mulf %139, %238 : vector<1x128xf32>
    %240 = arith.addf %237, %239 : vector<1x128xf32>
    %241 = vector.broadcast %62 : f32 to vector<1x128xf32>
    %242 = arith.mulf %154, %241 : vector<1x128xf32>
    %243 = arith.addf %240, %242 : vector<1x128xf32>
    %244 = vector.broadcast %63 : f32 to vector<1x128xf32>
    %245 = arith.mulf %169, %244 : vector<1x128xf32>
    %246 = arith.addf %243, %245 : vector<1x128xf32>
    %247 = vector.broadcast %64 : f32 to vector<1x128xf32>
    %248 = arith.mulf %184, %247 : vector<1x128xf32>
    %249 = arith.addf %246, %248 : vector<1x128xf32>
    %250 = vector.broadcast %65 : f32 to vector<1x128xf32>
    %251 = arith.mulf %199, %250 : vector<1x128xf32>
    %252 = arith.addf %249, %251 : vector<1x128xf32>
    %253 = vector.broadcast %66 : f32 to vector<1x128xf32>
    %254 = arith.mulf %214, %253 : vector<1x128xf32>
    %255 = arith.addf %252, %254 : vector<1x128xf32>
    %256 = vector.broadcast %67 : f32 to vector<1x128xf32>
    %257 = arith.mulf %229, %256 : vector<1x128xf32>
    %258 = arith.addf %255, %257 : vector<1x128xf32>
    %259 = vector.broadcast %78 : f32 to vector<1x128xf32>
    %260 = arith.addf %258, %259 : vector<1x128xf32>
    %261 = vector.broadcast %68 : f32 to vector<1x128xf32>
    %262 = arith.mulf %94, %261 : vector<1x128xf32>
    %263 = vector.broadcast %69 : f32 to vector<1x128xf32>
    %264 = arith.mulf %109, %263 : vector<1x128xf32>
    %265 = arith.addf %262, %264 : vector<1x128xf32>
    %266 = vector.broadcast %70 : f32 to vector<1x128xf32>
    %267 = arith.mulf %124, %266 : vector<1x128xf32>
    %268 = arith.addf %265, %267 : vector<1x128xf32>
    %269 = vector.broadcast %71 : f32 to vector<1x128xf32>
    %270 = arith.mulf %139, %269 : vector<1x128xf32>
    %271 = arith.addf %268, %270 : vector<1x128xf32>
    %272 = vector.broadcast %72 : f32 to vector<1x128xf32>
    %273 = arith.mulf %154, %272 : vector<1x128xf32>
    %274 = arith.addf %271, %273 : vector<1x128xf32>
    %275 = vector.broadcast %73 : f32 to vector<1x128xf32>
    %276 = arith.mulf %169, %275 : vector<1x128xf32>
    %277 = arith.addf %274, %276 : vector<1x128xf32>
    %278 = vector.broadcast %74 : f32 to vector<1x128xf32>
    %279 = arith.mulf %184, %278 : vector<1x128xf32>
    %280 = arith.addf %277, %279 : vector<1x128xf32>
    %281 = vector.broadcast %75 : f32 to vector<1x128xf32>
    %282 = arith.mulf %199, %281 : vector<1x128xf32>
    %283 = arith.addf %280, %282 : vector<1x128xf32>
    %284 = vector.broadcast %76 : f32 to vector<1x128xf32>
    %285 = arith.mulf %214, %284 : vector<1x128xf32>
    %286 = arith.addf %283, %285 : vector<1x128xf32>
    %287 = vector.broadcast %77 : f32 to vector<1x128xf32>
    %288 = arith.mulf %229, %287 : vector<1x128xf32>
    %289 = arith.addf %286, %288 : vector<1x128xf32>
    %290 = vector.broadcast %79 : f32 to vector<1x128xf32>
    %291 = arith.addf %289, %290 : vector<1x128xf32>
    %292 = arith.maximumf %260, %291 : vector<1x128xf32>
    %293 = arith.subf %260, %292 : vector<1x128xf32>
    %294 = math.exp %293 : vector<1x128xf32>
    %295 = arith.subf %291, %292 : vector<1x128xf32>
    %296 = math.exp %295 : vector<1x128xf32>
    %297 = arith.addf %294, %296 : vector<1x128xf32>
    %298 = tpu.reciprocal %297 {approx = true} : vector<1x128xf32> -> vector<1x128xf32>
    %299 = arith.mulf %297, %298 : vector<1x128xf32>
    %cst_143 = arith.constant 2.000000e+00 : f32
    %300 = vector.broadcast %cst_143 : f32 to vector<1x128xf32>
    %301 = arith.subf %300, %299 : vector<1x128xf32>
    %302 = arith.mulf %298, %301 : vector<1x128xf32>
    %303 = arith.mulf %294, %302 : vector<1x128xf32>
    %c0_144 = arith.constant 0 : index
    %c0_145 = arith.constant 0 : index
    %c0_146 = arith.constant 0 : index
    %304 = vector.load %arg6[%c0_144, %c0_145, %c0_146] : memref<2x1x128xf32, #tpu.memory_space<vmem>>, vector<1x1x128xf32>
    %305 = vector.shape_cast %304 : vector<1x1x128xf32> to vector<1x128xf32>
    %306 = vector.shape_cast %303 : vector<1x128xf32> to vector<1x1x128xf32>
    tpu.vector_store %arg6[%c0_144, %c0_145, %c0_146], %306 {strides = array<i32>} : memref<2x1x128xf32, #tpu.memory_space<vmem>>, vector<1x1x128xf32>,
    %307 = arith.mulf %296, %302 : vector<1x128xf32>
    %c1_147 = arith.constant 1 : index
    %c0_148 = arith.constant 0 : index
    %c0_149 = arith.constant 0 : index
    %308 = vector.load %arg6[%c1_147, %c0_148, %c0_149] : memref<2x1x128xf32, #tpu.memory_space<vmem>>, vector<1x1x128xf32>
    %309 = vector.shape_cast %308 : vector<1x1x128xf32> to vector<1x128xf32>
    %310 = vector.shape_cast %307 : vector<1x128xf32> to vector<1x1x128xf32>
    tpu.vector_store %arg6[%c1_147, %c0_148, %c0_149], %310 {strides = array<i32>} : memref<2x1x128xf32, #tpu.memory_space<vmem>>, vector<1x1x128xf32>,
    return
  }
  func.func @transform_0(%arg0: i32) -> (i32, i32) {
    %c0_i32 = arith.constant 0 : i32
    %c0_i32_0 = arith.constant 0 : i32
    %c0_i32_1 = arith.constant 0 : i32
    return %c0_i32, %c0_i32_0 : i32, i32
  }
  func.func @transform_1(%arg0: i32) -> i32 {
    %c0_i32 = arith.constant 0 : i32
    %c0_i32_0 = arith.constant 0 : i32
    return %c0_i32 : i32
  }
  func.func @transform_2(%arg0: i32) -> (i32, i32) {
    %c0_i32 = arith.constant 0 : i32
    %c0_i32_0 = arith.constant 0 : i32
    %c0_i32_1 = arith.constant 0 : i32
    return %c0_i32, %c0_i32_0 : i32, i32
  }
  func.func @transform_3(%arg0: i32) -> i32 {
    %c0_i32 = arith.constant 0 : i32
    %c0_i32_0 = arith.constant 0 : i32
    return %c0_i32 : i32
  }
  func.func @transform_4(%arg0: i32) -> (i32, i32, i32) {
    %c0_i32 = arith.constant 0 : i32
    %c0_i32_0 = arith.constant 0 : i32
    %c0_i32_1 = arith.constant 0 : i32
    return %c0_i32, %arg0, %c0_i32_0 : i32, i32, i32
  }
  func.func @transform_5(%arg0: i32) -> (i32, i32, i32) {
    %c0_i32 = arith.constant 0 : i32
    %c0_i32_0 = arith.constant 0 : i32
    %c0_i32_1 = arith.constant 0 : i32
    return %c0_i32, %arg0, %c0_i32_0 : i32, i32, i32
  }
}

</mosaic_0001>

<llo_original>
// kernel: tpu_custom_call.1
$region0: #{tpu_custom_call.1}
  #allocation0 [shape = 'u32[]', space=smem, size = 0x4, offset = 0x4, fixed_abs, tag = 'smem constant byte address 0x4 - core index']
  #allocation1 [shape = 'u32[72,128]{1,0:T(1,128)}', space=vmem, size = 0x9000, scoped, tag = 'internal scratch']
  %s0 = inlined_call_operand.vmem [shape: f32[10,4], index: 0, kind: input, shape index: {}]
  %s1 = inlined_call_operand.vmem [shape: f32[10], index: 1, kind: input, shape index: {}]
  %s2 = inlined_call_operand.vmem [shape: f32[2,10], index: 2, kind: input, shape index: {}]
  %s3 = inlined_call_operand.vmem [shape: f32[2], index: 3, kind: input, shape index: {}]
  %s4 = inlined_call_operand.vmem [shape: f32[4,1,128], index: 4, kind: input, shape index: {}]
  %s5 = inlined_call_operand.hbm [shape: f32[2,1,128], index: 5, kind: output, shape index: {}]
  %s6 = sld [smem:[#allocation0]]
  $region46: #{tpu_custom_call.1} parent=0
    _
  %s8 = ssub.s32 1, %s6
  %s9 = scalar_select 0, %s8, %s6
  $region1: #{tpu_custom_call.1} parent=0
    #allocation2 [shape = 'u8[8192]{0}', space=smem, size = 0x2000, scoped, tag = 'input window, operand 0, single buffered']
    #allocation3 [shape = 's32[1]{0}', space=sflag, size = 0x4, scoped, tag = 'scoped memory for tpu_custom_call.1']
    #allocation4 [shape = 's32[1]{0}', space=sflag, size = 0x4, scoped, tag = 'scoped memory for tpu_custom_call.1']
    #allocation5 [shape = 'u8[512]{0}', space=smem, size = 0x200, scoped, tag = 'input window, operand 1, single buffered']
    #allocation6 [shape = 's32[1]{0}', space=sflag, size = 0x4, scoped, tag = 'scoped memory for tpu_custom_call.1']
    #allocation7 [shape = 'u8[1024]{0}', space=smem, size = 0x400, scoped, tag = 'input window, operand 2, single buffered']
    #allocation8 [shape = 'u8[512]{0}', space=smem, size = 0x200, scoped, tag = 'input window, operand 3, single buffered']
    #allocation9 [shape = 's32[1]{0}', space=sflag, size = 0x4, scoped, tag = 'scoped memory for tpu_custom_call.1']
    #allocation10 [shape = 'u8[1024]{0}', space=vmem, size = 0x400, scoped, tag = 'output window, operand 0, single buffered']
    %10 = vsyncpa [#allocation4], 0
    %11 = vsyncpa [#allocation6], 0
    %12 = vsyncpa [#allocation9], 0
    %13 = vsyncpa [#allocation3], 0
    // Predicated region
    $region2: #{tpu_custom_call.1} parent=1 // pred_check
      _
    $region3: #{tpu_custom_call.1} parent=1 // pred_check_branch
      %15 = sbr.rel (0) target = $region5
    $region4: #{tpu_custom_call.1} parent=1 // pred_region
      %17 = vsyncadd [#allocation4], 0
      %s18 = sshll.u32 %s0, 4
      %s19 = int_to_ptr.vmem [resolvable:$true] %s18
      %24 = dma.vmem_to_smem %s19, 256, [#allocation2], [#allocation4], 128, 128, 8
    $region5: #{tpu_custom_call.1} parent=1 // pred_fallthru
      _
    // Predicated region
    $region6: #{tpu_custom_call.1} parent=1 // pred_check
      _
    $region7: #{tpu_custom_call.1} parent=1 // pred_check_branch
      %26 = sbr.rel (0) target = $region9
    $region8: #{tpu_custom_call.1} parent=1 // pred_region
      %28 = vsyncadd [#allocation6], 0
      %s30 = sshll.u32 %s1, 4
      %s31 = int_to_ptr.vmem [resolvable:$true] %s30
      %33 = dma.vmem_to_smem %s31, 16, [#allocation5], [#allocation6]
    $region9: #{tpu_custom_call.1} parent=1 // pred_fallthru
      _
    // Predicated region
    $region10: #{tpu_custom_call.1} parent=1 // pred_check
      _
    $region11: #{tpu_custom_call.1} parent=1 // pred_check_branch
      %35 = sbr.rel (0) target = $region13
    $region12: #{tpu_custom_call.1} parent=1 // pred_region
      %37 = vsyncadd [#allocation6], 0
      %s39 = sshll.u32 %s2, 4
      %s40 = int_to_ptr.vmem [resolvable:$true] %s39
      %42 = dma.vmem_to_smem %s40, 32, [#allocation7], [#allocation6]
    $region13: #{tpu_custom_call.1} parent=1 // pred_fallthru
      _
    // Predicated region
    $region14: #{tpu_custom_call.1} parent=1 // pred_check
      _
    $region15: #{tpu_custom_call.1} parent=1 // pred_check_branch
      %44 = sbr.rel (0) target = $region17
    $region16: #{tpu_custom_call.1} parent=1 // pred_region
      %46 = vsyncadd [#allocation9], 0
      %s48 = sshll.u32 %s3, 4
      %s49 = int_to_ptr.vmem [resolvable:$true] %s48
      %51 = dma.vmem_to_smem %s49, 16, [#allocation8], [#allocation9]
    $region17: #{tpu_custom_call.1} parent=1 // pred_fallthru
      _
    // Predicated region
    $region18: #{tpu_custom_call.1} parent=1 // pred_check
      _
    $region19: #{tpu_custom_call.1} parent=1 // pred_check_branch
      %53 = sbr.rel (0) target = $region21
    $region20: #{tpu_custom_call.1} parent=1 // pred_region
      _
    $region21: #{tpu_custom_call.1} parent=1 // pred_fallthru
      _
    // Predicated region
    $region22: #{tpu_custom_call.1} parent=1 // pred_check
      _
    $region23: #{tpu_custom_call.1} parent=1 // pred_check_branch
      %55 = sbr.rel (0) target = $region25
    $region24: #{tpu_custom_call.1} parent=1 // pred_region
      %57 = dma.done [#allocation4], 256
    $region25: #{tpu_custom_call.1} parent=1 // pred_fallthru
      _
    // Predicated region
    $region26: #{tpu_custom_call.1} parent=1 // pred_check
      _
    $region27: #{tpu_custom_call.1} parent=1 // pred_check_branch
      %59 = sbr.rel (0) target = $region29
    $region28: #{tpu_custom_call.1} parent=1 // pred_region
      %61 = dma.done [#allocation6], 16
    $region29: #{tpu_custom_call.1} parent=1 // pred_fallthru
      _
    // Predicated region
    $region30: #{tpu_custom_call.1} parent=1 // pred_check
      _
    $region31: #{tpu_custom_call.1} parent=1 // pred_check_branch
      %63 = sbr.rel (0) target = $region33
    $region32: #{tpu_custom_call.1} parent=1 // pred_region
      %65 = dma.done [#allocation6], 32
    $region33: #{tpu_custom_call.1} parent=1 // pred_fallthru
      _
    // Predicated region
    $region34: #{tpu_custom_call.1} parent=1 // pred_check
      _
    $region35: #{tpu_custom_call.1} parent=1 // pred_check_branch
      %67 = sbr.rel (0) target = $region37
    $region36: #{tpu_custom_call.1} parent=1 // pred_region
      %69 = dma.done [#allocation9], 16
    $region37: #{tpu_custom_call.1} parent=1 // pred_fallthru
      _
    %70 = sfence
    %v71 = vld [vmem:[%s4] sm:$0x1]
    %s72 = scalar_lea.vmem %s4, 1
    %v73 = vld [vmem:[%s72] sm:$0x1]
    %s74 = scalar_lea.vmem %s4, 2
    %v75 = vld [vmem:[%s74] sm:$0x1]
    %s76 = scalar_lea.vmem %s4, 3
    %v77 = vld [vmem:[%s76] sm:$0x1]
    %s78 = sld [smem:[#allocation2]]
    %s79 = sld [smem:[#allocation2 + $0x1]]
    %s80 = sld [smem:[#allocation2 + $0x2]]
    %s81 = sld [smem:[#allocation2 + $0x3]]
    %s82 = sld [smem:[#allocation2 + $0x80]]
    %s83 = sld [smem:[#allocation2 + $0x81]]
    %s84 = sld [smem:[#allocation2 + $0x82]]
    %s85 = sld [smem:[#allocation2 + $0x83]]
    %s86 = sld [smem:[#allocation2 + $0x100]]
    %s87 = sld [smem:[#allocation2 + $0x101]]
    %s88 = sld [smem:[#allocation2 + $0x102]]
    %s89 = sld [smem:[#allocation2 + $0x103]]
    %s90 = sld [smem:[#allocation2 + $0x180]]
    %s91 = sld [smem:[#allocation2 + $0x181]]
    %s92 = sld [smem:[#allocation2 + $0x182]]
    %s93 = sld [smem:[#allocation2 + $0x183]]
    %s94 = sld [smem:[#allocation2 + $0x200]]
    %s95 = sld [smem:[#allocation2 + $0x201]]
    %s96 = sld [smem:[#allocation2 + $0x202]]
    %s97 = sld [smem:[#allocation2 + $0x203]]
    %s98 = sld [smem:[#allocation2 + $0x280]]
    %s99 = sld [smem:[#allocation2 + $0x281]]
    %s100 = sld [smem:[#allocation2 + $0x282]]
    %s101 = sld [smem:[#allocation2 + $0x283]]
    %s102 = sld [smem:[#allocation2 + $0x300]]
    %s103 = sld [smem:[#allocation2 + $0x301]]
    %s104 = sld [smem:[#allocation2 + $0x302]]
    %s105 = sld [smem:[#allocation2 + $0x303]]
    %s106 = sld [smem:[#allocation2 + $0x380]]
    %s107 = sld [smem:[#allocation2 + $0x381]]
    %s108 = sld [smem:[#allocation2 + $0x382]]
    %s109 = sld [smem:[#allocation2 + $0x383]]
    %s110 = sld [smem:[#allocation2 + $0x400]]
    %s111 = sld [smem:[#allocation2 + $0x401]]
    %s112 = sld [smem:[#allocation2 + $0x402]]
    %s113 = sld [smem:[#allocation2 + $0x403]]
    %s114 = sld [smem:[#allocation2 + $0x480]]
    %s115 = sld [smem:[#allocation2 + $0x481]]
    %s116 = sld [smem:[#allocation2 + $0x482]]
    %s117 = sld [smem:[#allocation2 + $0x483]]
    %s118 = sld [smem:[#allocation5]]
    %s119 = sld [smem:[#allocation5 + $0x1]]
    %s120 = sld [smem:[#allocation5 + $0x2]]
    %s121 = sld [smem:[#allocation5 + $0x3]]
    %s122 = sld [smem:[#allocation5 + $0x4]]
    %s123 = sld [smem:[#allocation5 + $0x5]]
    %s124 = sld [smem:[#allocation5 + $0x6]]
    %s125 = sld [smem:[#allocation5 + $0x7]]
    %s126 = sld [smem:[#allocation5 + $0x8]]
    %s127 = sld [smem:[#allocation5 + $0x9]]
    %s128 = sld [smem:[#allocation7]]
    %s129 = sld [smem:[#allocation7 + $0x1]]
    %s130 = sld [smem:[#allocation7 + $0x2]]
    %s131 = sld [smem:[#allocation7 + $0x3]]
    %s132 = sld [smem:[#allocation7 + $0x4]]
    %s133 = sld [smem:[#allocation7 + $0x5]]
    %s134 = sld [smem:[#allocation7 + $0x6]]
    %s135 = sld [smem:[#allocation7 + $0x7]]
    %s136 = sld [smem:[#allocation7 + $0x8]]
    %s137 = sld [smem:[#allocation7 + $0x9]]
    %s138 = sld [smem:[#allocation7 + $0x80]]
    %s139 = sld [smem:[#allocation7 + $0x81]]
    %s140 = sld [smem:[#allocation7 + $0x82]]
    %s141 = sld [smem:[#allocation7 + $0x83]]
    %s142 = sld [smem:[#allocation7 + $0x84]]
    %s143 = sld [smem:[#allocation7 + $0x85]]
    %s144 = sld [smem:[#allocation7 + $0x86]]
    %s145 = sld [smem:[#allocation7 + $0x87]]
    %s146 = sld [smem:[#allocation7 + $0x88]]
    %s147 = sld [smem:[#allocation7 + $0x89]]
    %s148 = sld [smem:[#allocation8]]
    %s149 = sld [smem:[#allocation8 + $0x1]]
    %v150 = vstv %s78
    %v151 = vmul.f32 %v71, %v150
    %v152 = vstv %s79
    %v153 = vmul.f32 %v73, %v152
    %v154 = vadd.f32 %v151, %v153
    %v155 = vstv %s80
    %v156 = vmul.f32 %v75, %v155
    %v157 = vadd.f32 %v154, %v156
    %v158 = vstv %s81
    %v159 = vmul.f32 %v77, %v158
    %v160 = vadd.f32 %v157, %v159
    %v161 = vstv %s118
    %v162 = vadd.f32 %v160, %v161
    %v163 = vmax.f32 %v162, 0.0
    %v164 = vstv %s82
    %v165 = vmul.f32 %v71, %v164
    %v166 = vstv %s83
    %v167 = vmul.f32 %v73, %v166
    %v168 = vadd.f32 %v165, %v167
    %v169 = vstv %s84
    %v170 = vmul.f32 %v75, %v169
    %v171 = vadd.f32 %v168, %v170
    %v172 = vstv %s85
    %v173 = vmul.f32 %v77, %v172
    %v174 = vadd.f32 %v171, %v173
    %v175 = vstv %s119
    %v176 = vadd.f32 %v174, %v175
    %v177 = vmax.f32 %v176, 0.0
    %v178 = vstv %s86
    %v179 = vmul.f32 %v71, %v178
    %v180 = vstv %s87
    %v181 = vmul.f32 %v73, %v180
    %v182 = vadd.f32 %v179, %v181
    %v183 = vstv %s88
    %v184 = vmul.f32 %v75, %v183
    %v185 = vadd.f32 %v182, %v184
    %v186 = vstv %s89
    %v187 = vmul.f32 %v77, %v186
    %v188 = vadd.f32 %v185, %v187
    %v189 = vstv %s120
    %v190 = vadd.f32 %v188, %v189
    %v191 = vmax.f32 %v190, 0.0
    %v192 = vstv %s90
    %v193 = vmul.f32 %v71, %v192
    %v194 = vstv %s91
    %v195 = vmul.f32 %v73, %v194
    %v196 = vadd.f32 %v193, %v195
    %v197 = vstv %s92
    %v198 = vmul.f32 %v75, %v197
    %v199 = vadd.f32 %v196, %v198
    %v200 = vstv %s93
    %v201 = vmul.f32 %v77, %v200
    %v202 = vadd.f32 %v199, %v201
    %v203 = vstv %s121
    %v204 = vadd.f32 %v202, %v203
    %v205 = vmax.f32 %v204, 0.0
    %v206 = vstv %s94
    %v207 = vmul.f32 %v71, %v206
    %v208 = vstv %s95
    %v209 = vmul.f32 %v73, %v208
    %v210 = vadd.f32 %v207, %v209
    %v211 = vstv %s96
    %v212 = vmul.f32 %v75, %v211
    %v213 = vadd.f32 %v210, %v212
    %v214 = vstv %s97
    %v215 = vmul.f32 %v77, %v214
    %v216 = vadd.f32 %v213, %v215
    %v217 = vstv %s122
    %v218 = vadd.f32 %v216, %v217
    %v219 = vmax.f32 %v218, 0.0
    %v220 = vstv %s98
    %v221 = vmul.f32 %v71, %v220
    %v222 = vstv %s99
    %v223 = vmul.f32 %v73, %v222
    %v224 = vadd.f32 %v221, %v223
    %v225 = vstv %s100
    %v226 = vmul.f32 %v75, %v225
    %v227 = vadd.f32 %v224, %v226
    %v228 = vstv %s101
    %v229 = vmul.f32 %v77, %v228
    %v230 = vadd.f32 %v227, %v229
    %v231 = vstv %s123
    %v232 = vadd.f32 %v230, %v231
    %v233 = vmax.f32 %v232, 0.0
    %v234 = vstv %s102
    %v235 = vmul.f32 %v71, %v234
    %v236 = vstv %s103
    %v237 = vmul.f32 %v73, %v236
    %v238 = vadd.f32 %v235, %v237
    %v239 = vstv %s104
    %v240 = vmul.f32 %v75, %v239
    %v241 = vadd.f32 %v238, %v240
    %v242 = vstv %s105
    %v243 = vmul.f32 %v77, %v242
    %v244 = vadd.f32 %v241, %v243
    %v245 = vstv %s124
    %v246 = vadd.f32 %v244, %v245
    %v247 = vmax.f32 %v246, 0.0
    %v248 = vstv %s106
    %v249 = vmul.f32 %v71, %v248
    %v250 = vstv %s107
    %v251 = vmul.f32 %v73, %v250
    %v252 = vadd.f32 %v249, %v251
    %v253 = vstv %s108
    %v254 = vmul.f32 %v75, %v253
    %v255 = vadd.f32 %v252, %v254
    %v256 = vstv %s109
    %v257 = vmul.f32 %v77, %v256
    %v258 = vadd.f32 %v255, %v257
    %v259 = vstv %s125
    %v260 = vadd.f32 %v258, %v259
    %v261 = vmax.f32 %v260, 0.0
    %v262 = vstv %s110
    %v263 = vmul.f32 %v71, %v262
    %v264 = vstv %s111
    %v265 = vmul.f32 %v73, %v264
    %v266 = vadd.f32 %v263, %v265
    %v267 = vstv %s112
    %v268 = vmul.f32 %v75, %v267
    %v269 = vadd.f32 %v266, %v268
    %v270 = vstv %s113
    %v271 = vmul.f32 %v77, %v270
    %v272 = vadd.f32 %v269, %v271
    %v273 = vstv %s126
    %v274 = vadd.f32 %v272, %v273
    %v275 = vmax.f32 %v274, 0.0
    %v276 = vstv %s114
    %v277 = vmul.f32 %v71, %v276
    %v278 = vstv %s115
    %v279 = vmul.f32 %v73, %v278
    %v280 = vadd.f32 %v277, %v279
    %v281 = vstv %s116
    %v282 = vmul.f32 %v75, %v281
    %v283 = vadd.f32 %v280, %v282
    %v284 = vstv %s117
    %v285 = vmul.f32 %v77, %v284
    %v286 = vadd.f32 %v283, %v285
    %v287 = vstv %s127
    %v288 = vadd.f32 %v286, %v287
    %v289 = vmax.f32 %v288, 0.0
    %v290 = vstv %s128
    %v291 = vmul.f32 %v163, %v290
    %v292 = vstv %s129
    %v293 = vmul.f32 %v177, %v292
    %v294 = vadd.f32 %v291, %v293
    %v295 = vstv %s130
    %v296 = vmul.f32 %v191, %v295
    %v297 = vadd.f32 %v294, %v296
    %v298 = vstv %s131
    %v299 = vmul.f32 %v205, %v298
    %v300 = vadd.f32 %v297, %v299
    %v301 = vstv %s132
    %v302 = vmul.f32 %v219, %v301
    %v303 = vadd.f32 %v300, %v302
    %v304 = vstv %s133
    %v305 = vmul.f32 %v233, %v304
    %v306 = vadd.f32 %v303, %v305
    %v307 = vstv %s134
    %v308 = vmul.f32 %v247, %v307
    %v309 = vadd.f32 %v306, %v308
    %v310 = vstv %s135
    %v311 = vmul.f32 %v261, %v310
    %v312 = vadd.f32 %v309, %v311
    %v313 = vstv %s136
    %v314 = vmul.f32 %v275, %v313
    %v315 = vadd.f32 %v312, %v314
    %v316 = vstv %s137
    %v317 = vmul.f32 %v289, %v316
    %v318 = vadd.f32 %v315, %v317
    %v319 = vstv %s148
    %v320 = vadd.f32 %v318, %v319
    %v321 = vstv %s138
    %v322 = vmul.f32 %v163, %v321
    %v323 = vstv %s139
    %v324 = vmul.f32 %v177, %v323
    %v325 = vadd.f32 %v322, %v324
    %v326 = vstv %s140
    %v327 = vmul.f32 %v191, %v326
    %v328 = vadd.f32 %v325, %v327
    %v329 = vstv %s141
    %v330 = vmul.f32 %v205, %v329
    %v331 = vadd.f32 %v328, %v330
    %v332 = vstv %s142
    %v333 = vmul.f32 %v219, %v332
    %v334 = vadd.f32 %v331, %v333
    %v335 = vstv %s143
    %v336 = vmul.f32 %v233, %v335
    %v337 = vadd.f32 %v334, %v336
    %v338 = vstv %s144
    %v339 = vmul.f32 %v247, %v338
    %v340 = vadd.f32 %v337, %v339
    %v341 = vstv %s145
    %v342 = vmul.f32 %v261, %v341
    %v343 = vadd.f32 %v340, %v342
    %v344 = vstv %s146
    %v345 = vmul.f32 %v275, %v344
    %v346 = vadd.f32 %v343, %v345
    %v347 = vstv %s147
    %v348 = vmul.f32 %v289, %v347
    %v349 = vadd.f32 %v346, %v348
    %v350 = vstv %s149
    %v351 = vadd.f32 %v349, %v350
    %v352 = vmax.f32 %v320, %v351
    %v353 = vsub.f32 %v320, %v352
    %v354 = vmul.f32 %v353, 1.442695
    %v355 = vpow.pop %v354
    %v356 = vsub.f32 %v351, %v352
    %v357 = vmul.f32 %v356, 1.442695
    %v358 = vpow.pop %v357
    %v359 = vadd.f32 %v355, %v358
    %v360 = vrcp.pop %v359
    %v361 = vmul.f32 %v359, %v360
    %v362 = vsub.f32 2.0, %v361
    %v363 = vmul.f32 %v360, %v362
    %v364 = vmul.f32 %v355, %v363
    %365 = vst [vmem:[#allocation10] sm:$0x1] %v364
    %v366 = vmul.f32 %v358, %v363
    %s367 = scalar_lea.vmem [#allocation10], 1
    %368 = vst [vmem:[%s367] sm:$0x1] %v366
    // Predicated region
    $region38: #{tpu_custom_call.1} parent=1 // pred_check
      _
    $region39: #{tpu_custom_call.1} parent=1 // pred_check_branch
      %370 = sbr.rel (0) target = $region41
    $region40: #{tpu_custom_call.1} parent=1 // pred_region
      %372 = vsyncadd [#allocation3], 0
      %s373 = sshll.u32 [#allocation10], 4
      %s374 = int_to_ptr.vmem [resolvable:$true] %s373
      %s375 = sshll.u32 %s5, 4
      %s376 = int_to_ptr.hbm [resolvable:$true] %s375
      %381 = dma.vmem_to_hbm [thread:$0]  %s374, 32, %s376, [#allocation3], 16, 16, 1
    $region41: #{tpu_custom_call.1} parent=1 // pred_fallthru
      _
    // Predicated region
    $region42: #{tpu_custom_call.1} parent=1 // pred_check
      _
    $region43: #{tpu_custom_call.1} parent=1 // pred_check_branch
      %383 = sbr.rel (0) target = $region45
    $region44: #{tpu_custom_call.1} parent=1 // pred_region
      %385 = dma.done [#allocation3], 32
    $region45: #{tpu_custom_call.1} parent=1 // pred_fallthru
      _
    %386 = vsyncpa [#allocation3], 1
    %387 = vsyncpa [#allocation4], 1
    %388 = vsyncpa [#allocation6], 1
    %389 = vsyncpa [#allocation9], 1

</llo_original>
